<compile_context>
chip_gen: v7x
topology: tpu7x:2x2x1
jax: 0.10.0
libtpu: 0.0.40
codegen_flags: <defaults>
</compile_context>

<pallas_src>
import jax
import jax.numpy as jnp
from jax.experimental import pallas as pl
from jax.experimental.pallas import tpu as pltpu


# ------------------------------- kernel --------------------------------------

def _fr_kernel(x1_ref, x2_ref, w1_ref, w2_ref, o_ref):
    """ReLU + two channel-major matmuls, sublane-aligned half stores.

    x1_ref/x2_ref: (C_in,  TILE_HW)   stride-2 samples, branch 1 / branch 2
    w1_ref/w2_ref: (C_half, C_in)     torch-native conv weights (squeezed 1x1)
    o_ref:         (C_out,  TILE_HW)  rows [:C_half] = conv_1, [C_half:] = conv_2
    """
    c_half = w1_ref.shape[0]
    a = jnp.maximum(x1_ref[...], 0.0)                                   # VPU
    b = jnp.maximum(x2_ref[...], 0.0)
    o_ref[:c_half, :] = jnp.dot(
        w1_ref[...], a, preferred_element_type=jnp.float32).astype(o_ref.dtype)
    o_ref[c_half:, :] = jnp.dot(
        w2_ref[...], b, preferred_element_type=jnp.float32).astype(o_ref.dtype)
    # TODO(synk): pseudoBatchNorm() definition not provided in the benchmark
    # snippet; it is treated as identity (no normalization / affine applied).


# ------------------------------- wrapper --------------------------------------

def _vmem_capacity_bytes():
    try:
        cap = getattr(pltpu.get_tpu_info(), "vmem_capacity_bytes", None)
        if cap:
            return int(cap)
    except Exception:
        pass
    return 64 << 20          # conservative fallback: v7x per-TensorCore VMEM


def _pick_tile_hw(HW, n_batch, col_bytes, budget_bytes, lane=128, max_tile=16384):
    """Largest lane-aligned HW tile whose double-buffered footprint fits.

    col_bytes = bytes per spatial column across all streams (x1 + x2 + out).
    Guarantees >= 2 grid tiles when N == 1 and HW is large enough, so the
    "parallel" grid can be sharded across v7x's two TensorCores.
    """
    t = budget_bytes // max(2 * col_bytes, 1)       # 2x: pipeline double-buffers
    t = int(min(t, max_tile, HW))
    if t >= HW:
        if n_batch > 1 or HW < 2 * lane:
            return HW                               # full dim: no lane constraint
        t = (HW + 1) // 2                           # split HW -> >= 2 tiles
    return max(lane, (t // lane) * lane)            # tiled blocks must be %128


def factorized_reduce(x_nchw, w1, w2):
    """FactorizedReduce forward.

    x_nchw: (N, C_in, H, W)
    w1, w2: (C_out//2, C_in)  -- torch-native 1x1 conv weights (squeezed), bias-free.
    Returns (N, C_out, ceil(H/2), ceil(W/2)) in NCHW.
    """
    N, C_in, H, W = x_nchw.shape
    C_half = w1.shape[0]
    C_out = 2 * C_half
    Ho = (H + 1) // 2
    Wo = (W + 1) // 2
    HW = Ho * Wo

    # Branch 1: stride-2 samples anchored at (0, 0) — always in bounds.
    x1 = x_nchw[:, :, ::2, ::2]                          # (N, C_in, Ho, Wo)

    # Branch 2: stride-2 samples anchored at (1, 1).  For odd H/W the last
    # sample row/col lands on the zero pad and contributes exactly 0, so we
    # only sample in-bounds pixels and zero-pad the 1/4-size sampled tensor
    # (never the full activation).
    x2 = x_nchw[:, :, 1::2, 1::2]                        # (N, C_in, H//2, W//2)
    Hi2, Wi2 = x2.shape[2], x2.shape[3]
    if Hi2 != Ho or Wi2 != Wo:
        x2 = jnp.pad(x2, ((0, 0), (0, 0), (0, Ho - Hi2), (0, Wo - Wi2)))

    # Contiguous reshapes: NCHW stays NCHW, spatial flattened onto the lane dim.
    x1f = x1.reshape(N, C_in, HW)
    x2f = x2.reshape(N, C_in, HW)

    itemsize = jnp.dtype(x_nchw.dtype).itemsize
    vmem_cap = _vmem_capacity_bytes()
    vmem_limit = min(vmem_cap * 3 // 4, 96 << 20)        # 96 MiB v5e/v6e, 48 MiB v7x
    weight_bytes = 2 * (2 * C_half * C_in * jnp.dtype(w1.dtype).itemsize)  # 2 bufs
    headroom = 4 << 20                                   # Mosaic internal scratch
    budget = max(vmem_limit - weight_bytes - headroom, 4 << 20)

    col_bytes = (2 * C_in + C_out) * itemsize            # x1 + x2 + out per HW col
    tile_hw = _pick_tile_hw(HW, N, col_bytes, budget)
    grid = (N, pl.cdiv(HW, tile_hw))

    out_flat = pl.pallas_call(
        _fr_kernel,
        out_shape=jax.ShapeDtypeStruct((N, C_out, HW), x_nchw.dtype),
        grid_spec=pltpu.PrefetchScalarGridSpec(
            num_scalar_prefetch=0,
            grid=grid,
            in_specs=[
                pl.BlockSpec((None, C_in, tile_hw), lambda n, t: (n, 0, t)),
                pl.BlockSpec((None, C_in, tile_hw), lambda n, t: (n, 0, t)),
                pl.BlockSpec((C_half, C_in), lambda n, t: (0, 0)),   # resident
                pl.BlockSpec((C_half, C_in), lambda n, t: (0, 0)),   # resident
            ],
            out_specs=pl.BlockSpec((None, C_out, tile_hw), lambda n, t: (n, 0, t)),
        ),
        compiler_params=pltpu.CompilerParams(
            dimension_semantics=("parallel", "parallel"),
            vmem_limit_bytes=int(vmem_limit),
            # Let XLA fuse the stride-2 slice / reshape producers straight into
            # the Pallas input DMA instead of an extra HBM round-trip.
            allow_input_fusion=[True, True, False, False],
        ),
    )(x1f, x2f, w1, w2)

    # (N, C_out, Ho*Wo) -> NCHW: contiguous reshape, no transpose needed.
    return out_flat.reshape(N, C_out, Ho, Wo)


# ------------------------------ reference -------------------------------------

def _reference(x_nchw, w1, w2):
    """Pure-JAX reference mirroring the PyTorch forward (bias-free 1x1 convs)."""
    xr = jnp.maximum(x_nchw, 0.0)
    y = jnp.pad(xr, ((0, 0), (0, 0), (0, 1), (0, 1)))

    def conv1x1_s2(inp, w):                      # inp NCHW, w (C_half, C_in)
        s = inp[:, :, ::2, ::2]
        return jnp.einsum('nchw,dc->ndhw', s, w)

    o1 = conv1x1_s2(xr, w1)
    o2 = conv1x1_s2(y[:, :, 1:, 1:], w2)
    return jnp.concatenate([o1, o2], axis=1)


if __name__ == "__main__":
    key = jax.random.PRNGKey(0)
    kx, k1, k2, kx2, kx3, k3, k4 = jax.random.split(key, 7)

    # 1) Even spatial size (no branch-2 padding needed at all).
    N, C_in, H, W = 2, 4, 16, 16
    C_out = 8
    C_half = C_out // 2
    x = jax.random.normal(kx, (N, C_in, H, W), dtype=jnp.float32)
    w1 = jax.random.normal(k1, (C_half, C_in), dtype=jnp.float32) * 0.1
    w2 = jax.random.normal(k2, (C_half, C_in), dtype=jnp.float32) * 0.1

    out = jax.block_until_ready(factorized_reduce(x, w1, w2))
    ref = _reference(x, w1, w2)
    assert out.shape == (N, C_out, H // 2, W // 2), out.shape
    assert jnp.allclose(out, ref, atol=1e-5, rtol=1e-5), "even-size mismatch"

    # 2) Odd spatial size: branch-2's last row/col is exactly zero (pad path).
    x_odd = jax.random.normal(kx2, (N, C_in, 15, 15), dtype=jnp.float32)
    out_o = jax.block_until_ready(factorized_reduce(x_odd, w1, w2))
    ref_o = _reference(x_odd, w1, w2)
    assert out_o.shape == (N, C_out, 8, 8), out_o.shape
    assert jnp.allclose(out_o, ref_o, atol=1e-5, rtol=1e-5), "odd-size mismatch"

    # 3) Single batch, larger spatial: exercises HW tiling + the >=2-tile grid.
    x_big = jax.random.normal(kx3, (1, 16, 64, 64), dtype=jnp.float32)
    w1b = jax.random.normal(k3, (8, 16), dtype=jnp.float32) * 0.1
    w2b = jax.random.normal(k4, (8, 16), dtype=jnp.float32) * 0.1
    out_b = jax.block_until_ready(factorized_reduce(x_big, w1b, w2b))
    ref_b = _reference(x_big, w1b, w2b)
    assert out_b.shape == (1, 16, 32, 32), out_b.shape
    assert jnp.allclose(out_b, ref_b, atol=1e-4, rtol=1e-4), "tiled-path mismatch"

    print("KERNEL_OK")
</pallas_src>

<mosaic_0001>
module attributes {stable_mosaic.version = 11 : i64} {
  func.func @_fr_kernel(%arg0: i32, %arg1: i32, %arg2: memref<1x4x64xf32, #tpu.memory_space<vmem>>, %arg3: memref<1x4x64xf32, #tpu.memory_space<vmem>>, %arg4: memref<4x4xf32, #tpu.memory_space<vmem>>, %arg5: memref<4x4xf32, #tpu.memory_space<vmem>>, %arg6: memref<1x8x64xf32, #tpu.memory_space<vmem>>) attributes {dimension_semantics = [#tpu.dimension_semantics<parallel>, #tpu.dimension_semantics<parallel>], iteration_bounds = array<i64: 2, 1>, scalar_prefetch = 0 : i64, scratch_operands = 0 : i64, tpu.core_type = #tpu.core_type<tc>, window_params = [{transform_indices = @transform_0, window_bounds = array<i64: 1, 4, 64>}, {transform_indices = @transform_1, window_bounds = array<i64: 1, 4, 64>}, {pipeline_mode = #tpu.pipeline_mode<synchronous>, transform_indices = @transform_2, window_bounds = array<i64: 4, 4>}, {pipeline_mode = #tpu.pipeline_mode<synchronous>, transform_indices = @transform_3, window_bounds = array<i64: 4, 4>}, {transform_indices = @transform_4, window_bounds = array<i64: 1, 8, 64>}]} {
    %c0 = arith.constant 0 : index
    %c0_0 = arith.constant 0 : index
    %c0_1 = arith.constant 0 : index
    %0 = vector.load %arg2[%c0, %c0_0, %c0_1] : memref<1x4x64xf32, #tpu.memory_space<vmem>>, vector<1x4x64xf32>
    %1 = vector.shape_cast %0 : vector<1x4x64xf32> to vector<4x64xf32>
    %cst = arith.constant 0.000000e+00 : f32
    %2 = vector.broadcast %cst : f32 to vector<4x64xf32>
    %3 = arith.maximumf %1, %2 : vector<4x64xf32>
    %c0_2 = arith.constant 0 : index
    %c0_3 = arith.constant 0 : index
    %c0_4 = arith.constant 0 : index
    %4 = vector.load %arg3[%c0_2, %c0_3, %c0_4] : memref<1x4x64xf32, #tpu.memory_space<vmem>>, vector<1x4x64xf32>
    %5 = vector.shape_cast %4 : vector<1x4x64xf32> to vector<4x64xf32>
    %cst_5 = arith.constant 0.000000e+00 : f32
    %6 = vector.broadcast %cst_5 : f32 to vector<4x64xf32>
    %7 = arith.maximumf %5, %6 : vector<4x64xf32>
    %c0_6 = arith.constant 0 : index
    %c0_7 = arith.constant 0 : index
    %8 = vector.load %arg4[%c0_6, %c0_7] : memref<4x4xf32, #tpu.memory_space<vmem>>, vector<4x4xf32>
    %cst_8 = arith.constant dense<0.000000e+00> : vector<4x64xf32>
    %9 = tpu.matmul %8, %3, %cst_8 {dimension_numbers = #tpu.dot_dimension_numbers<[1], [0], [0], [1], [0, 0, 1, 1], [], []>} : vector<4x4xf32>, vector<4x64xf32>, vector<4x64xf32> -> vector<4x64xf32>
    %c0_9 = arith.constant 0 : index
    %c0_10 = arith.constant 0 : index
    %c0_11 = arith.constant 0 : index
    %10 = vector.load %arg6[%c0_9, %c0_10, %c0_11] : memref<1x8x64xf32, #tpu.memory_space<vmem>>, vector<1x4x64xf32>
    %11 = vector.shape_cast %10 : vector<1x4x64xf32> to vector<4x64xf32>
    %12 = vector.shape_cast %9 : vector<4x64xf32> to vector<1x4x64xf32>
    tpu.vector_store %arg6[%c0_9, %c0_10, %c0_11], %12 {strides = array<i32>} : memref<1x8x64xf32, #tpu.memory_space<vmem>>, vector<1x4x64xf32>,
    %c0_12 = arith.constant 0 : index
    %c0_13 = arith.constant 0 : index
    %13 = vector.load %arg5[%c0_12, %c0_13] : memref<4x4xf32, #tpu.memory_space<vmem>>, vector<4x4xf32>
    %cst_14 = arith.constant dense<0.000000e+00> : vector<4x64xf32>
    %14 = tpu.matmul %13, %7, %cst_14 {dimension_numbers = #tpu.dot_dimension_numbers<[1], [0], [0], [1], [0, 0, 1, 1], [], []>} : vector<4x4xf32>, vector<4x64xf32>, vector<4x64xf32> -> vector<4x64xf32>
    %c0_15 = arith.constant 0 : index
    %c4 = arith.constant 4 : index
    %c0_16 = arith.constant 0 : index
    %15 = vector.load %arg6[%c0_15, %c4, %c0_16] : memref<1x8x64xf32, #tpu.memory_space<vmem>>, vector<1x4x64xf32>
    %16 = vector.shape_cast %15 : vector<1x4x64xf32> to vector<4x64xf32>
    %17 = vector.shape_cast %14 : vector<4x64xf32> to vector<1x4x64xf32>
    tpu.vector_store %arg6[%c0_15, %c4, %c0_16], %17 {strides = array<i32>} : memref<1x8x64xf32, #tpu.memory_space<vmem>>, vector<1x4x64xf32>,
    return
  }
  func.func @transform_0(%arg0: i32, %arg1: i32) -> (i32, i32, i32) {
    %c0_i32 = arith.constant 0 : i32
    %c0_i32_0 = arith.constant 0 : i32
    return %arg0, %c0_i32, %arg1 : i32, i32, i32
  }
  func.func @transform_1(%arg0: i32, %arg1: i32) -> (i32, i32, i32) {
    %c0_i32 = arith.constant 0 : i32
    %c0_i32_0 = arith.constant 0 : i32
    return %arg0, %c0_i32, %arg1 : i32, i32, i32
  }
  func.func @transform_2(%arg0: i32, %arg1: i32) -> (i32, i32) {
    %c0_i32 = arith.constant 0 : i32
    %c0_i32_0 = arith.constant 0 : i32
    %c0_i32_1 = arith.constant 0 : i32
    return %c0_i32, %c0_i32_0 : i32, i32
  }
  func.func @transform_3(%arg0: i32, %arg1: i32) -> (i32, i32) {
    %c0_i32 = arith.constant 0 : i32
    %c0_i32_0 = arith.constant 0 : i32
    %c0_i32_1 = arith.constant 0 : i32
    return %c0_i32, %c0_i32_0 : i32, i32
  }
  func.func @transform_4(%arg0: i32, %arg1: i32) -> (i32, i32, i32) {
    %c0_i32 = arith.constant 0 : i32
    %c0_i32_0 = arith.constant 0 : i32
    return %arg0, %c0_i32, %arg1 : i32, i32, i32
  }
}

</mosaic_0001>

<llo_original>
// kernel: tpu_custom_call.1
$region0: #{tpu_custom_call.1}
  #allocation0 [shape = 'u32[]', space=smem, size = 0x4, offset = 0x4, fixed_abs, tag = 'smem constant byte address 0x4 - core index']
  #allocation1 [shape = 'u32[144,128]{1,0:T(1,128)}', space=vmem, size = 0x12000, scoped, tag = 'internal scratch']
  %s0 = inlined_call_operand.hbm [shape: f32[2,4,64], index: 0, kind: input, shape index: {}]
  %s1 = inlined_call_operand.hbm [shape: f32[2,4,64], index: 1, kind: input, shape index: {}]
  %s2 = inlined_call_operand.vmem [shape: f32[4,4], index: 2, kind: input, shape index: {}]
  %s3 = inlined_call_operand.vmem [shape: f32[4,4], index: 3, kind: input, shape index: {}]
  %s4 = inlined_call_operand.hbm [shape: f32[2,8,64], index: 4, kind: output, shape index: {}]
  %s5 = sld [smem:[#allocation0]]
  $region57: #{tpu_custom_call.1} parent=0
    _
  %s7 = ssub.s32 1, %s5
  %s8 = scalar_select 0, %s7, %s5
  $region1: #{tpu_custom_call.1} parent=0
    #allocation2 [shape = 'u8[4096]{0}', space=vmem, size = 0x1000, scoped, tag = 'input window, operand 0']
    #allocation3 [shape = 's32[2]{0}', space=sflag, size = 0x8, scoped, tag = 'scoped memory for tpu_custom_call.1']
    #allocation4 [shape = 's32[2]{0}', space=sflag, size = 0x8, scoped, tag = 'scoped memory for tpu_custom_call.1']
    #allocation5 [shape = 'u8[4096]{0}', space=vmem, size = 0x1000, scoped, tag = 'input window, operand 1']
    #allocation6 [shape = 's32[2]{0}', space=sflag, size = 0x8, scoped, tag = 'scoped memory for tpu_custom_call.1']
    #allocation7 [shape = 'u8[8192]{0}', space=vmem, size = 0x2000, scoped, tag = 'output window, operand 0']
    %9 = vsyncpa [#allocation3], 0
    %s10 = scalar_lea.sflag [#allocation3], 1
    %11 = vsyncpa %s10, 0
    %12 = vsyncpa [#allocation6], 0
    %s13 = scalar_lea.sflag [#allocation6], 1
    %14 = vsyncpa %s13, 0
    %15 = vsyncpa [#allocation4], 0
    %s16 = scalar_lea.sflag [#allocation4], 1
    %17 = vsyncpa %s16, 0
    loop: start=0, step=1, limit=4
    $region2: #{tpu_custom_call.1} parent=1 // loop_pre_header
      _
    $region3: #{tpu_custom_call.1} parent=1 // loop_header
      %s19 = sphi 0, %s23
      %p20 = scmp.ge.s32.totalorder %s19, 4
      %s26 = sphi 0, %s38
      %s27 = sphi 0, %s34
      %s28 = sphi 0, %s26
      %s29 = sphi 0, %s27
      %s30 = sphi 0, %s28
      %s31 = sphi 0, %s29
      %s43 = sphi 0, %s45
      %s46 = sphi 0, %s43
      %s47 = sphi 0, %s46
      %s63 = sphi 0, %s47
      %s71 = sphi 0, %s73
      %s74 = sphi 0, %s71
      %s75 = sphi 0, %s74
      %s91 = sphi 0, %s75
      %s95 = sphi 0, %s95
      %s97 = sphi 0, %s95
      %s98 = sphi 0, %s97
      %s112 = sphi 0, %s98
      %s116 = sphi 0, %s116
      %s118 = sphi 0, %s116
      %s119 = sphi 0, %s118
      %s133 = sphi 0, %s119
      %s141 = sphi 0, %s143
      %s144 = sphi 0, %s141
      %s145 = sphi 0, %s144
      %s161 = sphi 0, %s145
    $region4: #{tpu_custom_call.1} parent=1 // loop_header_branch
      %22 = sbr.rel (%p20) target = $region8
    $region5: #{tpu_custom_call.1} parent=1 // loop_body
      %s24 = ssub.s32 %s19, 1
      %s25 = ssub.s32 %s19, 2
      %s32 = sadd.s32 1, %s27
      %p33 = scmp.ge.s32.totalorder %s32, 1
      %s34 = scalar_select %p33, 0, %s32
      %s35 = sadd.s32 1, %s26
      %s36 = scalar_select %p33, %s35, %s26
      %p37 = scmp.ge.s32.totalorder %s36, 2
      %s38 = scalar_select %p37, 0, %s36
      %s39 = ssub.s32 %s26, %s38
      %s40 = ssub.s32 %s27, %s34
      %s41 = sor.u32 %s39, %s40
      %p42 = scmp.eq.s32.totalorder %s41, 0
      %s44 = sadd.s32 %s43, 1
      %s45 = scalar_select %p42, %s43, %s44
      %p48 = pneg %p42
      %p49 = scmp.eq.s32.totalorder %s19, 1
      %p50 = por %p48, %p49
      %p51 = scmp.ne.s32.totalorder %s43, %s46
      %p52 = scmp.eq.s32.totalorder %s19, 0
      %p53 = por %p51, %p52
      %p54 = scmp.ne.s32.totalorder %s43, %s46
      %p55 = scmp.eq.s32.totalorder %s24, 1
      %p56 = por %p54, %p55
      %p57 = scmp.ne.s32.totalorder %s46, %s47
      %p58 = scmp.eq.s32.totalorder %s24, 0
      %p59 = por %p57, %p58
      %p60 = scmp.ne.s32.totalorder %s46, %s47
      %p61 = scmp.eq.s32.totalorder %s25, 1
      %p62 = por %p60, %p61
      %p64 = scmp.ne.s32.totalorder %s47, %s63
      %p65 = scmp.eq.s32.totalorder %s25, 0
      %p66 = por %p64, %p65
      %s67 = ssub.s32 %s26, %s38
      %s68 = ssub.s32 %s27, %s34
      %s69 = sor.u32 %s67, %s68
      %p70 = scmp.eq.s32.totalorder %s69, 0
      %s72 = sadd.s32 %s71, 1
      %s73 = scalar_select %p70, %s71, %s72
      %p76 = pneg %p70
      %p77 = scmp.eq.s32.totalorder %s19, 1
      %p78 = por %p76, %p77
      %p79 = scmp.ne.s32.totalorder %s71, %s74
      %p80 = scmp.eq.s32.totalorder %s19, 0
      %p81 = por %p79, %p80
      %p82 = scmp.ne.s32.totalorder %s71, %s74
      %p83 = scmp.eq.s32.totalorder %s24, 1
      %p84 = por %p82, %p83
      %p85 = scmp.ne.s32.totalorder %s74, %s75
      %p86 = scmp.eq.s32.totalorder %s24, 0
      %p87 = por %p85, %p86
      %p88 = scmp.ne.s32.totalorder %s74, %s75
      %p89 = scmp.eq.s32.totalorder %s25, 1
      %p90 = por %p88, %p89
      %p92 = scmp.ne.s32.totalorder %s75, %s91
      %p93 = scmp.eq.s32.totalorder %s25, 0
      %p94 = por %p92, %p93
      %s96 = sadd.s32 %s95, 1
      %p99 = scmp.eq.s32.totalorder %s19, 1
      %p100 = scmp.ne.s32.totalorder %s95, %s97
      %p101 = scmp.eq.s32.totalorder %s19, 0
      %p102 = por %p100, %p101
      %p103 = scmp.ne.s32.totalorder %s95, %s97
      %p104 = scmp.eq.s32.totalorder %s24, 1
      %p105 = por %p103, %p104
      %p106 = scmp.ne.s32.totalorder %s97, %s98
      %p107 = scmp.eq.s32.totalorder %s24, 0
      %p108 = por %p106, %p107
      %p109 = scmp.ne.s32.totalorder %s97, %s98
      %p110 = scmp.eq.s32.totalorder %s25, 1
      %p111 = por %p109, %p110
      %p113 = scmp.ne.s32.totalorder %s98, %s112
      %p114 = scmp.eq.s32.totalorder %s25, 0
      %p115 = por %p113, %p114
      %s117 = sadd.s32 %s116, 1
      %p120 = scmp.eq.s32.totalorder %s19, 1
      %p121 = scmp.ne.s32.totalorder %s116, %s118
      %p122 = scmp.eq.s32.totalorder %s19, 0
      %p123 = por %p121, %p122
      %p124 = scmp.ne.s32.totalorder %s116, %s118
      %p125 = scmp.eq.s32.totalorder %s24, 1
      %p126 = por %p124, %p125
      %p127 = scmp.ne.s32.totalorder %s118, %s119
      %p128 = scmp.eq.s32.totalorder %s24, 0
      %p129 = por %p127, %p128
      %p130 = scmp.ne.s32.totalorder %s118, %s119
      %p131 = scmp.eq.s32.totalorder %s25, 1
      %p132 = por %p130, %p131
      %p134 = scmp.ne.s32.totalorder %s119, %s133
      %p135 = scmp.eq.s32.totalorder %s25, 0
      %p136 = por %p134, %p135
      %s137 = ssub.s32 %s26, %s38
      %s138 = ssub.s32 %s27, %s34
      %s139 = sor.u32 %s137, %s138
      %p140 = scmp.eq.s32.totalorder %s139, 0
      %s142 = sadd.s32 %s141, 1
      %s143 = scalar_select %p140, %s141, %s142
      %p146 = pneg %p140
      %p147 = scmp.eq.s32.totalorder %s19, 1
      %p148 = por %p146, %p147
      %p149 = scmp.ne.s32.totalorder %s141, %s144
      %p150 = scmp.eq.s32.totalorder %s19, 0
      %p151 = por %p149, %p150
      %p152 = scmp.ne.s32.totalorder %s141, %s144
      %p153 = scmp.eq.s32.totalorder %s24, 1
      %p154 = por %p152, %p153
      %p155 = scmp.ne.s32.totalorder %s144, %s145
      %p156 = scmp.eq.s32.totalorder %s24, 0
      %p157 = por %p155, %p156
      %p158 = scmp.ne.s32.totalorder %s144, %s145
      %p159 = scmp.eq.s32.totalorder %s25, 1
      %p160 = por %p158, %p159
      %p162 = scmp.ne.s32.totalorder %s145, %s161
      %p163 = scmp.eq.s32.totalorder %s25, 0
      %p164 = por %p162, %p163
      %p165 = scmp.le.s32.totalorder 1, %s19
      %p166 = scmp.lt.s32.totalorder %s19, 3
      %p167 = pnand %p165, %p166
      %p168 = pneg %p167
      // Predicated region
      $region9: #{tpu_custom_call.1} parent=5 // pred_check
        _
      $region10: #{tpu_custom_call.1} parent=5 // pred_check_branch
        %170 = sbr.rel (%p167) target = $region12
      $region11: #{tpu_custom_call.1} parent=5 // pred_region
        %s171 = ssub.s32 %s19, 1
        // Predicated region
        $region13: #{tpu_custom_call.1} parent=11 // pred_check
          %p172 = pneg %p108
        $region14: #{tpu_custom_call.1} parent=11 // pred_check_branch
          %174 = sbr.rel (%p172) target = $region16
        $region15: #{tpu_custom_call.1} parent=11 // pred_region
          _
        $region16: #{tpu_custom_call.1} parent=11 // pred_fallthru
          _
        // Predicated region
        $region17: #{tpu_custom_call.1} parent=11 // pred_check
          %p175 = pneg %p129
        $region18: #{tpu_custom_call.1} parent=11 // pred_check_branch
          %177 = sbr.rel (%p175) target = $region20
        $region19: #{tpu_custom_call.1} parent=11 // pred_region
          _
        $region20: #{tpu_custom_call.1} parent=11 // pred_fallthru
          _
      $region12: #{tpu_custom_call.1} parent=5 // pred_fallthru
        _
      %p178 = scmp.lt.s32.totalorder %s19, 2
      // Predicated region
      $region21: #{tpu_custom_call.1} parent=5 // pred_check
        %p179 = pneg %p178
      $region22: #{tpu_custom_call.1} parent=5 // pred_check_branch
        %181 = sbr.rel (%p179) target = $region24
      $region23: #{tpu_custom_call.1} parent=5 // pred_region
        // Predicated region
        $region25: #{tpu_custom_call.1} parent=23 // pred_check
          %p182 = pneg %p53
        $region26: #{tpu_custom_call.1} parent=23 // pred_check_branch
          %184 = sbr.rel (%p182) target = $region28
        $region27: #{tpu_custom_call.1} parent=23 // pred_region
          %s185 = sand.u32 %s43, 1
          %s186 = scalar_lea.sflag [#allocation3], %s185
          %s187 = sand.u32 %s43, 1
          %s188 = smul.addr %s187, 4
          %s189 = scalar_lea.vmem [#allocation2], %s188
          %s191 = ssub.s32 64, 64
          %192 = vsyncadd %s186, %s191
          %s193 = sadd.s32 %s27, %s26
          %s194 = smul.addr %s193, 64
          %s195 = scalar_lea.hbm %s0, %s194
          %s197 = sshll.u32 %s189, 4
          %s198 = int_to_ptr.vmem [resolvable:$true] %s197
          %200 = dma.hbm_to_vmem [thread:$0]  %s195, 64, %s198, %s186
        $region28: #{tpu_custom_call.1} parent=23 // pred_fallthru
          _
        // Predicated region
        $region29: #{tpu_custom_call.1} parent=23 // pred_check
          %p201 = pneg %p81
        $region30: #{tpu_custom_call.1} parent=23 // pred_check_branch
          %203 = sbr.rel (%p201) target = $region32
        $region31: #{tpu_custom_call.1} parent=23 // pred_region
          %s204 = sand.u32 %s71, 1
          %s205 = scalar_lea.sflag [#allocation6], %s204
          %s206 = sand.u32 %s71, 1
          %s207 = smul.addr %s206, 4
          %s208 = scalar_lea.vmem [#allocation5], %s207
          %s210 = ssub.s32 64, 64
          %211 = vsyncadd %s205, %s210
          %s212 = sadd.s32 %s27, %s26
          %s213 = smul.addr %s212, 64
          %s214 = scalar_lea.hbm %s1, %s213
          %s216 = sshll.u32 %s208, 4
          %s217 = int_to_ptr.vmem [resolvable:$true] %s216
          %219 = dma.hbm_to_vmem [thread:$0]  %s214, 64, %s217, %s205
        $region32: #{tpu_custom_call.1} parent=23 // pred_fallthru
          _
      $region24: #{tpu_custom_call.1} parent=5 // pred_fallthru
        _
      %p220 = scmp.le.s32.totalorder 1, %s19
      %p221 = scmp.lt.s32.totalorder %s19, 3
      %p222 = pnand %p220, %p221
      %p223 = pneg %p222
      // Predicated region
      $region33: #{tpu_custom_call.1} parent=5 // pred_check
        _
      $region34: #{tpu_custom_call.1} parent=5 // pred_check_branch
        %225 = sbr.rel (%p222) target = $region36
      $region35: #{tpu_custom_call.1} parent=5 // pred_region
        %s226 = ssub.s32 %s19, 1
        %s227 = sand.u32 %s46, 1
        %s228 = scalar_lea.sflag [#allocation3], %s227
        %s229 = sand.u32 %s46, 1
        %s230 = smul.addr %s229, 4
        %s231 = scalar_lea.vmem [#allocation2], %s230
        // Predicated region
        $region37: #{tpu_custom_call.1} parent=35 // pred_check
          %p232 = pneg %p59
        $region38: #{tpu_custom_call.1} parent=35 // pred_check_branch
          %234 = sbr.rel (%p232) target = $region40
        $region39: #{tpu_custom_call.1} parent=35 // pred_region
          %235 = dma.done %s228, 64
        $region40: #{tpu_custom_call.1} parent=35 // pred_fallthru
          _
        %s236 = sand.u32 %s74, 1
        %s237 = scalar_lea.sflag [#allocation6], %s236
        %s238 = sand.u32 %s74, 1
        %s239 = smul.addr %s238, 4
        %s240 = scalar_lea.vmem [#allocation5], %s239
        // Predicated region
        $region41: #{tpu_custom_call.1} parent=35 // pred_check
          %p241 = pneg %p87
        $region42: #{tpu_custom_call.1} parent=35 // pred_check_branch
          %243 = sbr.rel (%p241) target = $region44
        $region43: #{tpu_custom_call.1} parent=35 // pred_region
          %244 = dma.done %s237, 64
        $region44: #{tpu_custom_call.1} parent=35 // pred_fallthru
          _
        %s245 = sand.u32 %s46, 1
        %s246 = scalar_lea.sflag [#allocation3], %s245
        %s247 = sand.u32 %s46, 1
        %s248 = smul.addr %s247, 4
        %s249 = scalar_lea.vmem [#allocation2], %s248
        %p250 = pneg %p59
        %p251 = pneg %p56
        %s252 = sand.u32 %s74, 1
        %s253 = scalar_lea.sflag [#allocation6], %s252
        %s254 = sand.u32 %s74, 1
        %s255 = smul.addr %s254, 4
        %s256 = scalar_lea.vmem [#allocation5], %s255
        %p257 = pneg %p87
        %p258 = pneg %p84
        %p259 = pneg %p108
        %p260 = pneg %p105
        %p261 = pneg %p129
        %p262 = pneg %p126
        %p263 = pneg %p157
        %p264 = pneg %p154
        %s265 = sand.u32 %s144, 1
        %s266 = scalar_lea.sflag [#allocation4], %s265
        %s267 = sand.u32 %s144, 1
        %s268 = smul.addr %s267, 8
        %s269 = scalar_lea.vmem [#allocation7], %s268
        %v270 = vld [vmem:[%s231] sm:$0xf]
        %v271 = vmax.f32 %v270, 0.0
        %v272 = vld [vmem:[%s240] sm:$0xf]
        %v273 = vmax.f32 %v272, 0.0
        %v274 = vld [vmem:[%s2] sm:$0xf]
        %vm275 = vcmask 31744
        %v277 = vsel %vm275, %v274, 0
        %vm279 = vcmask 1043456
        %v281 = vsel %vm279, %v271, 0
        %283 = vmatprep.subr.mxu0 0.0
        %284 = vmatpush1.msra.mxu0 %v281
        %285 = vmatprep.subr.mxu0 0.0
        %286 = vmatpush1.msra.mxu0 0.0
        %287 = vmatprep.subr.mxu0 0.0
        %288 = vmatpush1.msra.mxu0 0.0
        %289 = vmatprep.subr.mxu0 0.0
        %290 = vmatpush1.msra.mxu0 0.0
        %291 = vmatprep.subr.mxu0 0.0
        %292 = vmatpush1.msra.mxu0 0.0
        %293 = vmatprep.subr.mxu0 0.0
        %294 = vmatpush1.msra.mxu0 0.0
        %295 = vmatprep.subr.mxu0 0.0
        %296 = vmatpush1.msra.mxu0 0.0
        %297 = vmatprep.subr.mxu0 0.0
        %298 = vmatpush1.msra.mxu0 0.0
        %299 = vmatprep.subr.mxu0 0.0
        %300 = vmatpush1.msra.mxu0 0.0
        %301 = vmatprep.subr.mxu0 0.0
        %302 = vmatpush1.msra.mxu0 0.0
        %303 = vmatprep.subr.mxu0 0.0
        %304 = vmatpush1.msra.mxu0 0.0
        %305 = vmatprep.subr.mxu0 0.0
        %306 = vmatpush1.msra.mxu0 0.0
        %307 = vmatprep.subr.mxu0 0.0
        %308 = vmatpush1.msra.mxu0 0.0
        %309 = vmatprep.subr.mxu0 0.0
        %310 = vmatpush1.msra.mxu0 0.0
        %311 = vmatprep.subr.mxu0 0.0
        %312 = vmatpush1.msra.mxu0 0.0
        %313 = vmatprep.subr.mxu0 0.0
        %314 = vmatpush1.msra.mxu0 0.0
        %315 = vmatprep.subr.mxu0 0.0
        %316 = vmatpush1.msra.mxu0 0.0
        %317 = vmatprep.subr.mxu0 0.0
        %318 = vmatpush1.msra.mxu0 0.0
        %319 = vmatprep.subr.mxu0 0.0
        %320 = vmatpush1.msra.mxu0 0.0
        %321 = vmatprep.subr.mxu0 0.0
        %322 = vmatpush1.msra.mxu0 0.0
        %323 = vmatprep.subr.mxu0 0.0
        %324 = vmatpush1.msra.mxu0 0.0
        %325 = vmatprep.subr.mxu0 0.0
        %326 = vmatpush1.msra.mxu0 0.0
        %327 = vmatprep.subr.mxu0 0.0
        %328 = vmatpush1.msra.mxu0 0.0
        %329 = vmatprep.subr.mxu0 0.0
        %330 = vmatpush1.msra.mxu0 0.0
        %331 = vmatprep.subr.mxu0 0.0
        %332 = vmatpush1.msra.mxu0 0.0
        %333 = vmatprep.subr.mxu0 0.0
        %334 = vmatpush1.msra.mxu0 0.0
        %335 = vmatprep.subr.mxu0 0.0
        %336 = vmatpush1.msra.mxu0 0.0
        %337 = vmatprep.subr.mxu0 0.0
        %338 = vmatpush1.msra.mxu0 0.0
        %339 = vmatprep.subr.mxu0 0.0
        %340 = vmatpush1.msra.mxu0 0.0
        %341 = vmatprep.subr.mxu0 0.0
        %342 = vmatpush1.msra.mxu0 0.0
        %343 = vmatprep.subr.mxu0 0.0
        %344 = vmatpush1.msra.mxu0 0.0
        %345 = vmatprep.subr.mxu0 0.0
        %346 = vmatpush1.msra.mxu0 0.0
        %347 = vmatprep.mubr.f32.mxu0 0.0
        %348 = vmatmul.mubr.f32.gmra.mrb[0].mxu0 %v277
        %v349 = vpop.f32.mrb[0].mxu0
        %v350 = vadd.f32 0.0, %v349
        %v351 = vpop.f32.mrb[0].mxu0
        %352 = vdwg.mxu0
        %vm353 = vcmask 519168
        %354 = vst.msk [vmem:[%s269] sm:$0xf] %vm353, %v350
        %v355 = vld [vmem:[%s3] sm:$0xf]
        %v357 = vsel %vm275, %v355, 0
        %v360 = vsel %vm279, %v273, 0
        %362 = vmatprep.subr.mxu0 0.0
        %363 = vmatpush1.msra.mxu0 %v360
        %364 = vmatprep.subr.mxu0 0.0
        %365 = vmatpush1.msra.mxu0 0.0
        %366 = vmatprep.subr.mxu0 0.0
        %367 = vmatpush1.msra.mxu0 0.0
        %368 = vmatprep.subr.mxu0 0.0
        %369 = vmatpush1.msra.mxu0 0.0
        %370 = vmatprep.subr.mxu0 0.0
        %371 = vmatpush1.msra.mxu0 0.0
        %372 = vmatprep.subr.mxu0 0.0
        %373 = vmatpush1.msra.mxu0 0.0
        %374 = vmatprep.subr.mxu0 0.0
        %375 = vmatpush1.msra.mxu0 0.0
        %376 = vmatprep.subr.mxu0 0.0
        %377 = vmatpush1.msra.mxu0 0.0
        %378 = vmatprep.subr.mxu0 0.0
        %379 = vmatpush1.msra.mxu0 0.0
        %380 = vmatprep.subr.mxu0 0.0
        %381 = vmatpush1.msra.mxu0 0.0
        %382 = vmatprep.subr.mxu0 0.0
        %383 = vmatpush1.msra.mxu0 0.0
        %384 = vmatprep.subr.mxu0 0.0
        %385 = vmatpush1.msra.mxu0 0.0
        %386 = vmatprep.subr.mxu0 0.0
        %387 = vmatpush1.msra.mxu0 0.0
        %388 = vmatprep.subr.mxu0 0.0
        %389 = vmatpush1.msra.mxu0 0.0
        %390 = vmatprep.subr.mxu0 0.0
        %391 = vmatpush1.msra.mxu0 0.0
        %392 = vmatprep.subr.mxu0 0.0
        %393 = vmatpush1.msra.mxu0 0.0
        %394 = vmatprep.subr.mxu0 0.0
        %395 = vmatpush1.msra.mxu0 0.0
        %396 = vmatprep.subr.mxu0 0.0
        %397 = vmatpush1.msra.mxu0 0.0
        %398 = vmatprep.subr.mxu0 0.0
        %399 = vmatpush1.msra.mxu0 0.0
        %400 = vmatprep.subr.mxu0 0.0
        %401 = vmatpush1.msra.mxu0 0.0
        %402 = vmatprep.subr.mxu0 0.0
        %403 = vmatpush1.msra.mxu0 0.0
        %404 = vmatprep.subr.mxu0 0.0
        %405 = vmatpush1.msra.mxu0 0.0
        %406 = vmatprep.subr.mxu0 0.0
        %407 = vmatpush1.msra.mxu0 0.0
        %408 = vmatprep.subr.mxu0 0.0
        %409 = vmatpush1.msra.mxu0 0.0
        %410 = vmatprep.subr.mxu0 0.0
        %411 = vmatpush1.msra.mxu0 0.0
        %412 = vmatprep.subr.mxu0 0.0
        %413 = vmatpush1.msra.mxu0 0.0
        %414 = vmatprep.subr.mxu0 0.0
        %415 = vmatpush1.msra.mxu0 0.0
        %416 = vmatprep.subr.mxu0 0.0
        %417 = vmatpush1.msra.mxu0 0.0
        %418 = vmatprep.subr.mxu0 0.0
        %419 = vmatpush1.msra.mxu0 0.0
        %420 = vmatprep.subr.mxu0 0.0
        %421 = vmatpush1.msra.mxu0 0.0
        %422 = vmatprep.subr.mxu0 0.0
        %423 = vmatpush1.msra.mxu0 0.0
        %424 = vmatprep.subr.mxu0 0.0
        %425 = vmatpush1.msra.mxu0 0.0
        %426 = vmatprep.mubr.f32.mxu0 0.0
        %427 = vmatmul.mubr.f32.gmra.mrb[0].mxu0 %v357
        %v428 = vpop.f32.mrb[0].mxu0
        %v429 = vadd.f32 0.0, %v428
        %v430 = vpop.f32.mrb[0].mxu0
        %431 = vdwg.mxu0
        %432 = vst.msk [vmem:[%s269 + $0x4] sm:$0xf] %vm353, %v429
        %s433 = sand.u32 %s144, 1
        %s434 = scalar_lea.sflag [#allocation4], %s433
        %s435 = sand.u32 %s144, 1
        %s436 = smul.addr %s435, 8
        %s437 = scalar_lea.vmem [#allocation7], %s436
        // Predicated region
        $region45: #{tpu_custom_call.1} parent=35 // pred_check
          %p438 = pneg %p154
        $region46: #{tpu_custom_call.1} parent=35 // pred_check_branch
          %440 = sbr.rel (%p438) target = $region48
        $region47: #{tpu_custom_call.1} parent=35 // pred_region
          %s442 = ssub.s32 128, 128
          %443 = vsyncadd %s434, %s442
          %s444 = sadd.s32 %s29, %s28
          %s445 = smul.addr %s444, 128
          %s446 = scalar_lea.hbm %s4, %s445
          %s448 = sshll.u32 %s437, 4
          %s449 = int_to_ptr.vmem [resolvable:$true] %s448
          %451 = dma.vmem_to_hbm [thread:$0]  %s449, 128, %s446, %s434
        $region48: #{tpu_custom_call.1} parent=35 // pred_fallthru
          _
      $region36: #{tpu_custom_call.1} parent=5 // pred_fallthru
        _
      %p452 = scmp.le.s32.totalorder 2, %s19
      // Predicated region
      $region49: #{tpu_custom_call.1} parent=5 // pred_check
        %p453 = pneg %p452
      $region50: #{tpu_custom_call.1} parent=5 // pred_check_branch
        %455 = sbr.rel (%p453) target = $region52
      $region51: #{tpu_custom_call.1} parent=5 // pred_region
        %s456 = ssub.s32 %s19, 2
        // Predicated region
        $region53: #{tpu_custom_call.1} parent=51 // pred_check
          %p457 = pneg %p160
        $region54: #{tpu_custom_call.1} parent=51 // pred_check_branch
          %459 = sbr.rel (%p457) target = $region56
        $region55: #{tpu_custom_call.1} parent=51 // pred_region
          %s460 = sand.u32 %s145, 1
          %s461 = scalar_lea.sflag [#allocation4], %s460
          %s462 = sand.u32 %s145, 1
          %s463 = smul.addr %s462, 8
          %s464 = scalar_lea.vmem [#allocation7], %s463
          %465 = dma.done %s461, 128
        $region56: #{tpu_custom_call.1} parent=51 // pred_fallthru
          _
      $region52: #{tpu_custom_call.1} parent=5 // pred_fallthru
        _
    $region6: #{tpu_custom_call.1} parent=1 // loop_footer
      %s23 = sadd.s32 1, %s19
    $region7: #{tpu_custom_call.1} parent=1 // loop_footer_branch
      %18 = sbr.rel target = $region3
    $region8: #{tpu_custom_call.1} parent=1 // loop_exit
      _
    %466 = vsyncpa [#allocation3], 1
    %s467 = scalar_lea.sflag [#allocation3], 1
    %468 = vsyncpa %s467, 1
    %469 = vsyncpa [#allocation6], 1
    %s470 = scalar_lea.sflag [#allocation6], 1
    %471 = vsyncpa %s470, 1
    %472 = vsyncpa [#allocation4], 1
    %s473 = scalar_lea.sflag [#allocation4], 1
    %474 = vsyncpa %s473, 1

</llo_original>
